<compile_context>
chip_gen: v7x
topology: tpu7x:2x2x1
jax: 0.10.0
libtpu: 0.0.40
codegen_flags: <defaults>
</compile_context>

<pallas_src>
import math

import jax
import jax.numpy as jnp
from jax.experimental import pallas as pl
from jax.experimental.pallas import tpu as pltpu


def _dvfz_kernel(x_ref, pe_ref, out_ref):
    """Lane-dense broadcast add; all refs are (t_cd, t_hw) blocks."""
    out_ref[...] = x_ref[...] + pe_ref[...]


def _pe_rows(params, c, d, w, dtype):
    """(c*d, w) PE table: PositionalEncodingZ output (before batch/h/w
    broadcast), channel-major and row-repeated by d so row r of the flattened
    c*d axis carries pe[channel = r // d].  Tiny: O(c*d*w) elements."""
    zs = jnp.arange(w, dtype=jnp.float32)[:, None]                        # (w, 1)
    div = jnp.exp(jnp.arange(0, c, 2, dtype=jnp.float32) *
                  (-math.log(10000.0) / c))                               # (c//2,)
    pe0 = jnp.concatenate([jnp.sin(zs * div), jnp.cos(zs * div)], -1)     # (w, c)
    pe0 = pe0.astype(dtype)                                               # .type(x.dtype)
    pe_lin = pe0 @ params["w"].T + params["b"]                            # nn.Linear
    pe_cw = pe_lin.T                                                      # (c, w) == permute(1, 0)
    return jnp.repeat(pe_cw, d, axis=0).astype(dtype)                     # (c*d, w)


def _vmem_capacity_bytes():
    """Per-core VMEM capacity; conservative fallback if the query fails."""
    try:
        info = pltpu.get_tpu_info()
        for name in ("vmem_capacity_bytes", "vmem_size_bytes", "vmem_bytes"):
            v = getattr(info, name, None)
            if v:
                return int(v)
    except Exception:
        pass
    return 64 << 20    # v7x per-TensorCore VMEM (smallest of v5e/v6e/v7x)


def _tile_candidates(total, unit):
    """Tile sizes t (descending) with total % t == 0 and (t % unit == 0 or
    t == total) -- i.e. (8,128)-legal tiles or the full extent."""
    cands = {total}
    if unit <= total:
        for t in range(unit, total + 1, unit):
            if total % t == 0:
                cands.add(t)
    return sorted(cands, reverse=True)


def _choose_tiles(n, cd, hw, w, itemsize, budget_bytes):
    """Pick (t_cd, t_hw): each x/out block under the VMEM budget, preferring
    the widest lane-dense hw tile.  t_hw is always a multiple of w so the
    resident PE tile pattern lines up with every hw block."""
    hw_unit = (w * 128) // math.gcd(w, 128)          # lcm(w, 128)
    hw_cands = _tile_candidates(hw, hw_unit)
    cd_cands = _tile_candidates(cd, 8)
    t_cd, t_hw = cd_cands[-1], hw_cands[-1]          # smallest legal: best effort
    for th in hw_cands:                              # widest lane-dense tile first
        fits = [tc for tc in cd_cands if tc * th * itemsize <= budget_bytes]
        if fits:
            t_cd, t_hw = fits[0], th
            break
    # v7x has 2 TensorCores per chip: guarantee >= 2 "parallel" grid steps.
    if n * (cd // t_cd) * (hw // t_hw) < 2:
        if len(cd_cands) > 1:
            t_cd = cd_cands[1]
        elif len(hw_cands) > 1:
            t_hw = hw_cands[1]
    return t_cd, t_hw


def dvfz_forward(x, params):
    """x: (n, c, d, h, w) float32 -> (n, c*d, h, w) float32 (DVFZModule.forward)."""
    n, c, d, h, w = x.shape
    assert c % 2 == 0, "feat_channels must be even (sin/cos split)"
    cd, hw = c * d, h * w
    itemsize = x.dtype.itemsize

    # Contiguous, layout-preserving reshape: full sublane occupancy even for d < 8.
    x3 = x.reshape(n, cd, hw)

    cap = _vmem_capacity_bytes()
    budget = max(2 << 20, min(8 << 20, cap // 12))   # multi-MiB per-block budget
    t_cd, t_hw = _choose_tiles(n, cd, hw, w, itemsize, budget)

    # Tiny PE array expanded to exactly one hw-tile width (t_hw % w == 0), so a
    # constant hw-block index keeps it VMEM-resident: no x-sized PE HBM stream.
    pe_rows = _pe_rows(params, c, d, w, x.dtype)               # (cd, w)
    pe_tile = jnp.tile(pe_rows, (1, t_hw // w))                # (cd, t_hw)

    block_bytes = t_cd * t_hw * itemsize
    # double-buffered x + out + pe blocks, plus headroom
    needed = 6 * block_bytes + (2 << 20)
    vmem_limit = int(min(max(needed, 32 << 20), cap))

    grid = (cd // t_cd, hw // t_hw, n)   # pe row-block outermost -> fetched once per row-block

    out3 = pl.pallas_call(
        _dvfz_kernel,
        out_shape=jax.ShapeDtypeStruct((n, cd, hw), x.dtype),
        grid=grid,
        in_specs=[
            # x: one batch element, a (t_cd, t_hw) lane-dense block
            pl.BlockSpec((None, t_cd, t_hw), lambda r, j, i: (i, r, j)),
            # pe: tiny table, constant across hw-tile and batch axes (resident)
            pl.BlockSpec((t_cd, t_hw), lambda r, j, i: (r, 0)),
        ],
        out_specs=pl.BlockSpec((None, t_cd, t_hw), lambda r, j, i: (i, r, j)),
        compiler_params=pltpu.CompilerParams(
            dimension_semantics=("parallel", "parallel", "parallel"),
            vmem_limit_bytes=vmem_limit),
        cost_estimate=pl.CostEstimate(
            flops=int(x.size),
            transcendentals=0,
            bytes_accessed=int(2 * x.size * itemsize + pe_tile.size * itemsize)),
    )(x3, pe_tile)

    # NOTE: when x is donated at the jit level, input_output_aliases={0: 0}
    # can reuse x3's HBM buffer for the output (halves peak footprint).
    # PyTorch's .view(n, c*d, h, w): contiguous reshape, no data movement.
    return out3.reshape(n, cd, h, w)


def dvfz_reference(x, params):
    """Pure-JAX replica of DVFZModule.forward (for correctness check)."""
    n, c, d, h, w = x.shape
    zs = jnp.arange(w, dtype=jnp.float32)[:, None]
    div = jnp.exp(jnp.arange(0, c, 2, dtype=jnp.float32) * (-math.log(10000.0) / c))
    pe0 = jnp.concatenate([jnp.sin(zs * div), jnp.cos(zs * div)], -1).astype(x.dtype)
    pe_lin = pe0 @ params["w"].T + params["b"]                            # (w, c)
    pe = jnp.transpose(pe_lin, (1, 0))                                    # (c, w)
    pe_full = jnp.broadcast_to(pe[None, :, None, None, :], (n, c, d, h, w))
    return (x + pe_full).reshape(n, c * d, h, w)


def init_params(key, feat_channels):
    """Deterministic synthetic nn.Linear(feat_channels, feat_channels) params."""
    kw, kb = jax.random.split(key)
    c = feat_channels
    return {
        "w": 0.1 * jax.random.normal(kw, (c, c), jnp.float32),   # (out, in)
        "b": 0.05 * jax.random.normal(kb, (c,), jnp.float32),
    }


if __name__ == "__main__":
    # feat_channels = c = 8 (even); c*d = 64 rows (multiple of 8);
    # h*w = 256 (multiple of 128 and of w) -> fully lane-dense blocks;
    # n = 2 -> at least two "parallel" grid steps (keeps v7x's 2nd TC busy).
    n, c, d, h, w = 2, 8, 8, 16, 16

    key = jax.random.PRNGKey(0)
    kx, kp = jax.random.split(key)
    x = jax.random.normal(kx, (n, c, d, h, w), dtype=jnp.float32)
    params = init_params(kp, c)

    ref = jax.block_until_ready(dvfz_reference(x, params))
    out = jax.block_until_ready(dvfz_forward(x, params))

    assert out.shape == (n, c * d, h, w)
    assert jnp.allclose(out, ref, atol=1e-5, rtol=1e-5)
    print("KERNEL_OK")
</pallas_src>

<mosaic_0001>
module attributes {stable_mosaic.version = 11 : i64} {
  func.func @_dvfz_kernel(%arg0: i32, %arg1: i32, %arg2: i32, %arg3: memref<1x64x256xf32, #tpu.memory_space<vmem>>, %arg4: memref<64x256xf32, #tpu.memory_space<vmem>>, %arg5: memref<1x64x256xf32, #tpu.memory_space<vmem>>) attributes {dimension_semantics = [#tpu.dimension_semantics<parallel>, #tpu.dimension_semantics<parallel>, #tpu.dimension_semantics<parallel>], iteration_bounds = array<i64: 1, 1, 2>, scalar_prefetch = 0 : i64, scratch_operands = 0 : i64, tpu.core_type = #tpu.core_type<tc>, window_params = [{transform_indices = @transform_0, window_bounds = array<i64: 1, 64, 256>}, {transform_indices = @transform_1, window_bounds = array<i64: 64, 256>}, {transform_indices = @transform_2, window_bounds = array<i64: 1, 64, 256>}]} {
    %c0 = arith.constant 0 : index
    %c0_0 = arith.constant 0 : index
    %c0_1 = arith.constant 0 : index
    %0 = vector.load %arg3[%c0, %c0_0, %c0_1] : memref<1x64x256xf32, #tpu.memory_space<vmem>>, vector<1x64x256xf32>
    %1 = vector.shape_cast %0 : vector<1x64x256xf32> to vector<64x256xf32>
    %c0_2 = arith.constant 0 : index
    %c0_3 = arith.constant 0 : index
    %2 = vector.load %arg4[%c0_2, %c0_3] : memref<64x256xf32, #tpu.memory_space<vmem>>, vector<64x256xf32>
    %3 = arith.addf %1, %2 : vector<64x256xf32>
    %c0_4 = arith.constant 0 : index
    %c0_5 = arith.constant 0 : index
    %c0_6 = arith.constant 0 : index
    %4 = vector.load %arg5[%c0_4, %c0_5, %c0_6] : memref<1x64x256xf32, #tpu.memory_space<vmem>>, vector<1x64x256xf32>
    %5 = vector.shape_cast %4 : vector<1x64x256xf32> to vector<64x256xf32>
    %6 = vector.shape_cast %3 : vector<64x256xf32> to vector<1x64x256xf32>
    tpu.vector_store %arg5[%c0_4, %c0_5, %c0_6], %6 {strides = array<i32>} : memref<1x64x256xf32, #tpu.memory_space<vmem>>, vector<1x64x256xf32>,
    return
  }
  func.func @transform_0(%arg0: i32, %arg1: i32, %arg2: i32) -> (i32, i32, i32) {
    %c0_i32 = arith.constant 0 : i32
    return %arg2, %arg0, %arg1 : i32, i32, i32
  }
  func.func @transform_1(%arg0: i32, %arg1: i32, %arg2: i32) -> (i32, i32) {
    %c0_i32 = arith.constant 0 : i32
    %c0_i32_0 = arith.constant 0 : i32
    return %arg0, %c0_i32 : i32, i32
  }
  func.func @transform_2(%arg0: i32, %arg1: i32, %arg2: i32) -> (i32, i32, i32) {
    %c0_i32 = arith.constant 0 : i32
    return %arg2, %arg0, %arg1 : i32, i32, i32
  }
}

</mosaic_0001>

<llo_original>
// kernel: tpu_custom_call.1
$region0: #{tpu_custom_call.1}
  #allocation0 [shape = 'u32[]', space=smem, size = 0x4, offset = 0x4, fixed_abs, tag = 'smem constant byte address 0x4 - core index']
  #allocation1 [shape = 'u32[144,128]{1,0:T(1,128)}', space=vmem, size = 0x12000, scoped, tag = 'internal scratch']
  %s0 = inlined_call_operand.hbm [shape: f32[2,64,256], index: 0, kind: input, shape index: {}]
  %s1 = inlined_call_operand.hbm [shape: f32[64,256], index: 1, kind: input, shape index: {}]
  %s2 = inlined_call_operand.hbm [shape: f32[2,64,256], index: 2, kind: output, shape index: {}]
  %s3 = sld [smem:[#allocation0]]
  $region49: #{tpu_custom_call.1} parent=0
    _
  %s5 = ssub.s32 1, %s3
  %s6 = scalar_select 0, %s5, %s3
  $region1: #{tpu_custom_call.1} parent=0
    #allocation2 [shape = 'u8[131072]{0}', space=vmem, size = 0x20000, scoped, tag = 'input window, operand 0']
    #allocation3 [shape = 's32[2]{0}', space=sflag, size = 0x8, scoped, tag = 'scoped memory for tpu_custom_call.1']
    #allocation4 [shape = 's32[2]{0}', space=sflag, size = 0x8, scoped, tag = 'scoped memory for tpu_custom_call.1']
    #allocation5 [shape = 'u8[65536]{0}', space=vmem, size = 0x10000, scoped, tag = 'input window, operand 1, single buffered']
    #allocation6 [shape = 's32[1]{0}', space=sflag, size = 0x4, scoped, tag = 'scoped memory for tpu_custom_call.1']
    #allocation7 [shape = 'u8[131072]{0}', space=vmem, size = 0x20000, scoped, tag = 'output window, operand 0']
    %7 = vsyncpa [#allocation3], 0
    %s8 = scalar_lea.sflag [#allocation3], 1
    %9 = vsyncpa %s8, 0
    %10 = vsyncpa [#allocation6], 0
    %11 = vsyncpa [#allocation4], 0
    %s12 = scalar_lea.sflag [#allocation4], 1
    %13 = vsyncpa %s12, 0
    loop: start=0, step=1, limit=4
    $region2: #{tpu_custom_call.1} parent=1 // loop_pre_header
      _
    $region3: #{tpu_custom_call.1} parent=1 // loop_header
      %s15 = sphi 0, %s19
      %p16 = scmp.ge.s32.totalorder %s15, 4
      %s22 = sphi 0, %s41
      %s23 = sphi 0, %s37
      %s24 = sphi 0, %s33
      %s25 = sphi 0, %s22
      %s26 = sphi 0, %s23
      %s27 = sphi 0, %s24
      %s28 = sphi 0, %s25
      %s29 = sphi 0, %s26
      %s30 = sphi 0, %s27
      %s48 = sphi 0, %s50
      %s51 = sphi 0, %s48
      %s52 = sphi 0, %s51
      %s68 = sphi 0, %s52
      %s74 = sphi 0, %s76
      %s77 = sphi 0, %s74
      %s78 = sphi 0, %s77
      %s94 = sphi 0, %s78
      %s104 = sphi 0, %s106
      %s107 = sphi 0, %s104
      %s108 = sphi 0, %s107
      %s124 = sphi 0, %s108
    $region4: #{tpu_custom_call.1} parent=1 // loop_header_branch
      %18 = sbr.rel (%p16) target = $region8
    $region5: #{tpu_custom_call.1} parent=1 // loop_body
      %s20 = ssub.s32 %s15, 1
      %s21 = ssub.s32 %s15, 2
      %s31 = sadd.s32 1, %s24
      %p32 = scmp.ge.s32.totalorder %s31, 2
      %s33 = scalar_select %p32, 0, %s31
      %s34 = sadd.s32 1, %s23
      %s35 = scalar_select %p32, %s34, %s23
      %p36 = scmp.ge.s32.totalorder %s35, 1
      %s37 = scalar_select %p36, 0, %s35
      %s38 = sadd.s32 1, %s22
      %s39 = scalar_select %p36, %s38, %s22
      %p40 = scmp.ge.s32.totalorder %s39, 1
      %s41 = scalar_select %p40, 0, %s39
      %s42 = ssub.s32 %s24, %s33
      %s43 = ssub.s32 %s22, %s41
      %s44 = sor.u32 %s42, %s43
      %s45 = ssub.s32 %s23, %s37
      %s46 = sor.u32 %s44, %s45
      %p47 = scmp.eq.s32.totalorder %s46, 0
      %s49 = sadd.s32 %s48, 1
      %s50 = scalar_select %p47, %s48, %s49
      %p53 = pneg %p47
      %p54 = scmp.eq.s32.totalorder %s15, 1
      %p55 = por %p53, %p54
      %p56 = scmp.ne.s32.totalorder %s48, %s51
      %p57 = scmp.eq.s32.totalorder %s15, 0
      %p58 = por %p56, %p57
      %p59 = scmp.ne.s32.totalorder %s48, %s51
      %p60 = scmp.eq.s32.totalorder %s20, 1
      %p61 = por %p59, %p60
      %p62 = scmp.ne.s32.totalorder %s51, %s52
      %p63 = scmp.eq.s32.totalorder %s20, 0
      %p64 = por %p62, %p63
      %p65 = scmp.ne.s32.totalorder %s51, %s52
      %p66 = scmp.eq.s32.totalorder %s21, 1
      %p67 = por %p65, %p66
      %p69 = scmp.ne.s32.totalorder %s52, %s68
      %p70 = scmp.eq.s32.totalorder %s21, 0
      %p71 = por %p69, %p70
      %s72 = ssub.s32 %s22, %s41
      %p73 = scmp.eq.s32.totalorder %s72, 0
      %s75 = sadd.s32 %s74, 1
      %s76 = scalar_select %p73, %s74, %s75
      %p79 = pneg %p73
      %p80 = scmp.eq.s32.totalorder %s15, 1
      %p81 = por %p79, %p80
      %p82 = scmp.ne.s32.totalorder %s74, %s77
      %p83 = scmp.eq.s32.totalorder %s15, 0
      %p84 = por %p82, %p83
      %p85 = scmp.ne.s32.totalorder %s74, %s77
      %p86 = scmp.eq.s32.totalorder %s20, 1
      %p87 = por %p85, %p86
      %p88 = scmp.ne.s32.totalorder %s77, %s78
      %p89 = scmp.eq.s32.totalorder %s20, 0
      %p90 = por %p88, %p89
      %p91 = scmp.ne.s32.totalorder %s77, %s78
      %p92 = scmp.eq.s32.totalorder %s21, 1
      %p93 = por %p91, %p92
      %p95 = scmp.ne.s32.totalorder %s78, %s94
      %p96 = scmp.eq.s32.totalorder %s21, 0
      %p97 = por %p95, %p96
      %s98 = ssub.s32 %s24, %s33
      %s99 = ssub.s32 %s22, %s41
      %s100 = sor.u32 %s98, %s99
      %s101 = ssub.s32 %s23, %s37
      %s102 = sor.u32 %s100, %s101
      %p103 = scmp.eq.s32.totalorder %s102, 0
      %s105 = sadd.s32 %s104, 1
      %s106 = scalar_select %p103, %s104, %s105
      %p109 = pneg %p103
      %p110 = scmp.eq.s32.totalorder %s15, 1
      %p111 = por %p109, %p110
      %p112 = scmp.ne.s32.totalorder %s104, %s107
      %p113 = scmp.eq.s32.totalorder %s15, 0
      %p114 = por %p112, %p113
      %p115 = scmp.ne.s32.totalorder %s104, %s107
      %p116 = scmp.eq.s32.totalorder %s20, 1
      %p117 = por %p115, %p116
      %p118 = scmp.ne.s32.totalorder %s107, %s108
      %p119 = scmp.eq.s32.totalorder %s20, 0
      %p120 = por %p118, %p119
      %p121 = scmp.ne.s32.totalorder %s107, %s108
      %p122 = scmp.eq.s32.totalorder %s21, 1
      %p123 = por %p121, %p122
      %p125 = scmp.ne.s32.totalorder %s108, %s124
      %p126 = scmp.eq.s32.totalorder %s21, 0
      %p127 = por %p125, %p126
      %p128 = scmp.le.s32.totalorder 1, %s15
      %p129 = scmp.lt.s32.totalorder %s15, 3
      %p130 = pnand %p128, %p129
      %p131 = pneg %p130
      // Predicated region
      $region9: #{tpu_custom_call.1} parent=5 // pred_check
        _
      $region10: #{tpu_custom_call.1} parent=5 // pred_check_branch
        %133 = sbr.rel (%p130) target = $region12
      $region11: #{tpu_custom_call.1} parent=5 // pred_region
        %s134 = ssub.s32 %s15, 1
        // Predicated region
        $region13: #{tpu_custom_call.1} parent=11 // pred_check
          %p135 = pneg %p90
        $region14: #{tpu_custom_call.1} parent=11 // pred_check_branch
          %137 = sbr.rel (%p135) target = $region16
        $region15: #{tpu_custom_call.1} parent=11 // pred_region
          %s138 = smul.u32 8, %s25
          %s140 = ssub.s32 2048, 2048
          %141 = vsyncadd [#allocation6], %s140
          %s142 = smul.addr %s138, 2
          %s143 = smul.addr %s142, 128
          %s144 = scalar_lea.hbm %s1, %s143
          %s145 = sshll.u32 [#allocation5], 4
          %s146 = int_to_ptr.vmem [resolvable:$true] %s145
          %151 = dma.hbm_to_vmem [thread:$0]  %s144, 2048, %s146, [#allocation6], 256, 256, 16
        $region16: #{tpu_custom_call.1} parent=11 // pred_fallthru
          _
      $region12: #{tpu_custom_call.1} parent=5 // pred_fallthru
        _
      %p152 = scmp.lt.s32.totalorder %s15, 2
      // Predicated region
      $region17: #{tpu_custom_call.1} parent=5 // pred_check
        %p153 = pneg %p152
      $region18: #{tpu_custom_call.1} parent=5 // pred_check_branch
        %155 = sbr.rel (%p153) target = $region20
      $region19: #{tpu_custom_call.1} parent=5 // pred_region
        // Predicated region
        $region21: #{tpu_custom_call.1} parent=19 // pred_check
          %p156 = pneg %p58
        $region22: #{tpu_custom_call.1} parent=19 // pred_check_branch
          %158 = sbr.rel (%p156) target = $region24
        $region23: #{tpu_custom_call.1} parent=19 // pred_region
          %s159 = sand.u32 %s48, 1
          %s160 = scalar_lea.sflag [#allocation3], %s159
          %s161 = sand.u32 %s48, 1
          %s162 = smul.addr %s161, 128
          %s163 = scalar_lea.vmem [#allocation2], %s162
          %s164 = smul.u32 8, %s22
          %s165 = smul.u32 2, %s23
          %s167 = ssub.s32 2048, 2048
          %168 = vsyncadd %s160, %s167
          %s169 = smul.addr %s164, 2
          %s170 = sadd.s32 %s165, %s169
          %s171 = smul.addr %s24, 16
          %s172 = sadd.s32 %s170, %s171
          %s173 = smul.addr %s172, 128
          %s174 = scalar_lea.hbm %s0, %s173
          %s175 = sshll.u32 %s163, 4
          %s176 = int_to_ptr.vmem [resolvable:$true] %s175
          %181 = dma.hbm_to_vmem [thread:$0]  %s174, 2048, %s176, %s160, 256, 256, 16
        $region24: #{tpu_custom_call.1} parent=19 // pred_fallthru
          _
      $region20: #{tpu_custom_call.1} parent=5 // pred_fallthru
        _
      %p182 = scmp.le.s32.totalorder 1, %s15
      %p183 = scmp.lt.s32.totalorder %s15, 3
      %p184 = pnand %p182, %p183
      %p185 = pneg %p184
      // Predicated region
      $region25: #{tpu_custom_call.1} parent=5 // pred_check
        _
      $region26: #{tpu_custom_call.1} parent=5 // pred_check_branch
        %187 = sbr.rel (%p184) target = $region28
      $region27: #{tpu_custom_call.1} parent=5 // pred_region
        %s188 = ssub.s32 %s15, 1
        %s189 = sand.u32 %s51, 1
        %s190 = scalar_lea.sflag [#allocation3], %s189
        %s191 = sand.u32 %s51, 1
        %s192 = smul.addr %s191, 128
        %s193 = scalar_lea.vmem [#allocation2], %s192
        // Predicated region
        $region29: #{tpu_custom_call.1} parent=27 // pred_check
          %p194 = pneg %p64
        $region30: #{tpu_custom_call.1} parent=27 // pred_check_branch
          %196 = sbr.rel (%p194) target = $region32
        $region31: #{tpu_custom_call.1} parent=27 // pred_region
          %197 = dma.done %s190, 2048
        $region32: #{tpu_custom_call.1} parent=27 // pred_fallthru
          _
        // Predicated region
        $region33: #{tpu_custom_call.1} parent=27 // pred_check
          %p198 = pneg %p90
        $region34: #{tpu_custom_call.1} parent=27 // pred_check_branch
          %200 = sbr.rel (%p198) target = $region36
        $region35: #{tpu_custom_call.1} parent=27 // pred_region
          %201 = dma.done [#allocation6], 2048
        $region36: #{tpu_custom_call.1} parent=27 // pred_fallthru
          _
        %s202 = sand.u32 %s51, 1
        %s203 = scalar_lea.sflag [#allocation3], %s202
        %s204 = sand.u32 %s51, 1
        %s205 = smul.addr %s204, 128
        %s206 = scalar_lea.vmem [#allocation2], %s205
        %p207 = pneg %p64
        %p208 = pneg %p61
        %p209 = pneg %p90
        %p210 = pneg %p87
        %p211 = pneg %p120
        %p212 = pneg %p117
        %s213 = sand.u32 %s107, 1
        %s214 = scalar_lea.sflag [#allocation4], %s213
        %s215 = sand.u32 %s107, 1
        %s216 = smul.addr %s215, 128
        %s217 = scalar_lea.vmem [#allocation7], %s216
        %s218 = smul.u32 8, %s25
        %s219 = smul.u32 2, %s26
        %s220 = smul.u32 8, %s25
        %s221 = smul.u32 8, %s25
        %s222 = smul.u32 2, %s26
        %v223 = vld [vmem:[%s193] sm:$0xff]
        %v224 = vld [vmem:[%s193 + $0x8] sm:$0xff]
        %v225 = vld [vmem:[%s193 + $0x10] sm:$0xff]
        %v226 = vld [vmem:[%s193 + $0x18] sm:$0xff]
        %v227 = vld [vmem:[%s193 + $0x20] sm:$0xff]
        %v228 = vld [vmem:[%s193 + $0x28] sm:$0xff]
        %v229 = vld [vmem:[%s193 + $0x30] sm:$0xff]
        %v230 = vld [vmem:[%s193 + $0x38] sm:$0xff]
        %v231 = vld [vmem:[%s193 + $0x40] sm:$0xff]
        %v232 = vld [vmem:[%s193 + $0x48] sm:$0xff]
        %v233 = vld [vmem:[%s193 + $0x50] sm:$0xff]
        %v234 = vld [vmem:[%s193 + $0x58] sm:$0xff]
        %v235 = vld [vmem:[%s193 + $0x60] sm:$0xff]
        %v236 = vld [vmem:[%s193 + $0x68] sm:$0xff]
        %v237 = vld [vmem:[%s193 + $0x70] sm:$0xff]
        %v238 = vld [vmem:[%s193 + $0x78] sm:$0xff]
        %v239 = vld [vmem:[#allocation5] sm:$0xff]
        %v240 = vld [vmem:[#allocation5 + $0x8] sm:$0xff]
        %v241 = vld [vmem:[#allocation5 + $0x10] sm:$0xff]
        %v242 = vld [vmem:[#allocation5 + $0x18] sm:$0xff]
        %v243 = vld [vmem:[#allocation5 + $0x20] sm:$0xff]
        %v244 = vld [vmem:[#allocation5 + $0x28] sm:$0xff]
        %v245 = vld [vmem:[#allocation5 + $0x30] sm:$0xff]
        %v246 = vld [vmem:[#allocation5 + $0x38] sm:$0xff]
        %v247 = vld [vmem:[#allocation5 + $0x40] sm:$0xff]
        %v248 = vld [vmem:[#allocation5 + $0x48] sm:$0xff]
        %v249 = vld [vmem:[#allocation5 + $0x50] sm:$0xff]
        %v250 = vld [vmem:[#allocation5 + $0x58] sm:$0xff]
        %v251 = vld [vmem:[#allocation5 + $0x60] sm:$0xff]
        %v252 = vld [vmem:[#allocation5 + $0x68] sm:$0xff]
        %v253 = vld [vmem:[#allocation5 + $0x70] sm:$0xff]
        %v254 = vld [vmem:[#allocation5 + $0x78] sm:$0xff]
        %v255 = vadd.f32 %v223, %v239
        %v256 = vadd.f32 %v224, %v240
        %v257 = vadd.f32 %v225, %v241
        %v258 = vadd.f32 %v226, %v242
        %v259 = vadd.f32 %v227, %v243
        %v260 = vadd.f32 %v228, %v244
        %v261 = vadd.f32 %v229, %v245
        %v262 = vadd.f32 %v230, %v246
        %v263 = vadd.f32 %v231, %v247
        %v264 = vadd.f32 %v232, %v248
        %v265 = vadd.f32 %v233, %v249
        %v266 = vadd.f32 %v234, %v250
        %v267 = vadd.f32 %v235, %v251
        %v268 = vadd.f32 %v236, %v252
        %v269 = vadd.f32 %v237, %v253
        %v270 = vadd.f32 %v238, %v254
        %271 = vst [vmem:[%s217] sm:$0xff] %v255
        %272 = vst [vmem:[%s217 + $0x8] sm:$0xff] %v256
        %273 = vst [vmem:[%s217 + $0x10] sm:$0xff] %v257
        %274 = vst [vmem:[%s217 + $0x18] sm:$0xff] %v258
        %275 = vst [vmem:[%s217 + $0x20] sm:$0xff] %v259
        %276 = vst [vmem:[%s217 + $0x28] sm:$0xff] %v260
        %277 = vst [vmem:[%s217 + $0x30] sm:$0xff] %v261
        %278 = vst [vmem:[%s217 + $0x38] sm:$0xff] %v262
        %279 = vst [vmem:[%s217 + $0x40] sm:$0xff] %v263
        %280 = vst [vmem:[%s217 + $0x48] sm:$0xff] %v264
        %281 = vst [vmem:[%s217 + $0x50] sm:$0xff] %v265
        %282 = vst [vmem:[%s217 + $0x58] sm:$0xff] %v266
        %283 = vst [vmem:[%s217 + $0x60] sm:$0xff] %v267
        %284 = vst [vmem:[%s217 + $0x68] sm:$0xff] %v268
        %285 = vst [vmem:[%s217 + $0x70] sm:$0xff] %v269
        %286 = vst [vmem:[%s217 + $0x78] sm:$0xff] %v270
        %s287 = sand.u32 %s107, 1
        %s288 = scalar_lea.sflag [#allocation4], %s287
        %s289 = sand.u32 %s107, 1
        %s290 = smul.addr %s289, 128
        %s291 = scalar_lea.vmem [#allocation7], %s290
        // Predicated region
        $region37: #{tpu_custom_call.1} parent=27 // pred_check
          %p292 = pneg %p117
        $region38: #{tpu_custom_call.1} parent=27 // pred_check_branch
          %294 = sbr.rel (%p292) target = $region40
        $region39: #{tpu_custom_call.1} parent=27 // pred_region
          %s295 = smul.u32 8, %s25
          %s296 = smul.u32 2, %s26
          %s298 = ssub.s32 2048, 2048
          %299 = vsyncadd %s288, %s298
          %s300 = smul.addr %s295, 2
          %s301 = sadd.s32 %s296, %s300
          %s302 = smul.addr %s27, 16
          %s303 = sadd.s32 %s301, %s302
          %s304 = smul.addr %s303, 128
          %s305 = scalar_lea.hbm %s2, %s304
          %s306 = sshll.u32 %s291, 4
          %s307 = int_to_ptr.vmem [resolvable:$true] %s306
          %312 = dma.vmem_to_hbm [thread:$0]  %s307, 2048, %s305, %s288, 256, 256, 16
        $region40: #{tpu_custom_call.1} parent=27 // pred_fallthru
          _
      $region28: #{tpu_custom_call.1} parent=5 // pred_fallthru
        _
      %p313 = scmp.le.s32.totalorder 2, %s15
      // Predicated region
      $region41: #{tpu_custom_call.1} parent=5 // pred_check
        %p314 = pneg %p313
      $region42: #{tpu_custom_call.1} parent=5 // pred_check_branch
        %316 = sbr.rel (%p314) target = $region44
      $region43: #{tpu_custom_call.1} parent=5 // pred_region
        %s317 = ssub.s32 %s15, 2
        // Predicated region
        $region45: #{tpu_custom_call.1} parent=43 // pred_check
          %p318 = pneg %p123
        $region46: #{tpu_custom_call.1} parent=43 // pred_check_branch
          %320 = sbr.rel (%p318) target = $region48
        $region47: #{tpu_custom_call.1} parent=43 // pred_region
          %s321 = sand.u32 %s108, 1
          %s322 = scalar_lea.sflag [#allocation4], %s321
          %s323 = sand.u32 %s108, 1
          %s324 = smul.addr %s323, 128
          %s325 = scalar_lea.vmem [#allocation7], %s324
          %326 = dma.done %s322, 2048
        $region48: #{tpu_custom_call.1} parent=43 // pred_fallthru
          _
      $region44: #{tpu_custom_call.1} parent=5 // pred_fallthru
        _
    $region6: #{tpu_custom_call.1} parent=1 // loop_footer
      %s19 = sadd.s32 1, %s15
    $region7: #{tpu_custom_call.1} parent=1 // loop_footer_branch
      %14 = sbr.rel target = $region3
    $region8: #{tpu_custom_call.1} parent=1 // loop_exit
      _
    %327 = vsyncpa [#allocation3], 1
    %s328 = scalar_lea.sflag [#allocation3], 1
    %329 = vsyncpa %s328, 1
    %330 = vsyncpa [#allocation6], 1
    %331 = vsyncpa [#allocation4], 1
    %s332 = scalar_lea.sflag [#allocation4], 1
    %333 = vsyncpa %s332, 1

</llo_original>
